<compile_context>
chip_gen: v5e
topology: v5e:2x2
jax: 0.10.0
libtpu: 0.0.40
codegen_flags: <defaults>
</compile_context>

<pallas_src>
import functools

import jax
import jax.numpy as jnp
from jax import lax
from jax.experimental import pallas as pl
from jax.experimental.pallas import tpu as pltpu

_LANES = 128
_TILE_BYTES = 4 * 1024 * 1024    # per input, per pipeline buffer
_CHUNK_BYTES = 256 * 1024        # in-kernel sub-chunk (bounds VMEM temporaries)
_PARALLEL_SPLITS = 2             # leading "parallel" axis (2 TCs on v7x)


def _round_up(a, b):
    return -(-a // b) * b


def _content_loss_kernel(x_ref, t_ref, out_ref, acc_ref, *, chunk, rows_valid,
                         spp, mask_rows):
    i = pl.program_id(0)              # parallel split (sharded across TCs on v7x)
    j = pl.program_id(1)              # sequential reduction step within split
    tr = x_ref.shape[0]               # rows in this block (static)
    base = (i * spp + j) * tr         # un-clamped global row offset of this block

    @pl.when(j == 0)
    def _():
        acc_ref[...] = jnp.zeros_like(acc_ref)

    def chunk_ssq(r0, crows):
        x = x_ref[pl.ds(r0, crows), :].astype(jnp.float32)
        t = t_ref[pl.ds(r0, crows), :].astype(jnp.float32)
        d = x - t
        sq = d * d
        if mask_rows:
            rid = base + r0 + lax.broadcasted_iota(jnp.int32, (crows, _LANES), 0)
            sq = jnp.where(rid < rows_valid, sq, 0.0)
        # Per-(sublane, lane) partial sums: pure VPU adds over whole vregs.
        return jnp.sum(sq.reshape(crows // 8, 8, _LANES), axis=0)

    n_full = tr // chunk
    tail = tr - n_full * chunk

    acc = jnp.zeros((8, _LANES), jnp.float32)
    if n_full > 0:
        def body(c, a):
            r0 = pl.multiple_of(c * chunk, chunk)
            return a + chunk_ssq(r0, chunk)
        acc = lax.fori_loop(0, n_full, body, acc,
                            unroll=max(1, min(4, n_full)))
    if tail:
        acc = acc + chunk_ssq(n_full * chunk, tail)

    acc_ref[...] += acc

    @pl.when(j == pl.num_programs(1) - 1)
    def _():
        out_ref[...] = acc_ref[...]


def content_loss(input_x, target):
    """Returns (input unchanged, scalar MSE loss) = ContentLoss.forward + .loss."""
    assert input_x.shape == target.shape, (input_x.shape, target.shape)
    n = int(input_x.size)

    itemsize = input_x.dtype.itemsize
    sub = max(8, 32 // itemsize)          # sublane packing multiple for dtype
    vec = sub * _LANES                    # elements in one packed (sub, 128) tile

    x_flat = input_x.reshape(-1)
    t_flat = target.reshape(-1)

    # Rare path: pad both sides with zeros up to one packed tile so the
    # lane-dense reshape below is layout-legal.  Equal zero padding contributes
    # nothing to sum((x-t)^2); the mean still divides by the true n.  Common
    # shapes (n % vec == 0) take the zero-copy path.
    n_pad = _round_up(n, vec)
    if n_pad != n:
        x_flat = jnp.pad(x_flat, (0, n_pad - n))
        t_flat = jnp.pad(t_flat, (0, n_pad - n))
    rows = n_pad // _LANES                # multiple of `sub`

    chunk = max(sub, _CHUNK_BYTES // (_LANES * itemsize))       # 512 for f32
    max_tile = max(chunk, _TILE_BYTES // (_LANES * itemsize))   # 8192 for f32

    if rows < chunk:
        tr = rows                          # single block == full row extent
    else:
        tr = min(max_tile, (rows // chunk) * chunk)
    nblocks = pl.cdiv(rows, tr)
    p = _PARALLEL_SPLITS if nblocks >= _PARALLEL_SPLITS else 1
    spp = pl.cdiv(nblocks, p)              # sequential steps per parallel split
    mask_rows = (p * spp * tr != rows)     # any partial / over-run block?

    x2d = x_flat.reshape(rows, _LANES)
    t2d = t_flat.reshape(rows, _LANES)

    last_blk = nblocks - 1

    def in_idx(i, j):
        # Over-run steps (from the parallel split rounding) clamp onto the last
        # real block; their contribution is masked to zero inside the kernel.
        return (jnp.minimum(i * spp + j, last_blk), 0)

    kernel = functools.partial(_content_loss_kernel, chunk=min(chunk, tr),
                               rows_valid=rows, spp=spp, mask_rows=mask_rows)

    partials = pl.pallas_call(
        kernel,
        out_shape=jax.ShapeDtypeStruct((p * 8, _LANES), jnp.float32),
        grid=(p, spp),
        in_specs=[pl.BlockSpec((tr, _LANES), in_idx),
                  pl.BlockSpec((tr, _LANES), in_idx)],
        out_specs=pl.BlockSpec((8, _LANES), lambda i, j: (i, 0)),
        scratch_shapes=[pltpu.VMEM((8, _LANES), jnp.float32)],
        compiler_params=pltpu.CompilerParams(
            dimension_semantics=("parallel", "arbitrary"),
            vmem_limit_bytes=32 * 1024 * 1024,
        ),
    )(x2d, t2d)

    loss = jnp.sum(partials) * jnp.float32(1.0 / n)
    return input_x, loss


class ContentLoss:
    """Mirrors the PyTorch module: holds a detached target; __call__(input)
    sets self.loss = mse_loss(input, target) and returns input unchanged."""

    def __init__(self, target):
        self.target = lax.stop_gradient(target)
        self.loss = None

    def __call__(self, x):
        out, self.loss = content_loss(x, self.target)
        return out


def _reference_loss(x, t):
    d = x.astype(jnp.float32) - t.astype(jnp.float32)
    return jnp.mean(d * d)


if __name__ == "__main__":
    key = jax.random.PRNGKey(0)

    def run_case(k, shape, dtype=jnp.float32):
        k1, k2 = jax.random.split(k)
        x = jax.random.normal(k1, shape, dtype=jnp.float32).astype(dtype)
        t = jax.random.normal(k2, shape, dtype=jnp.float32).astype(dtype)
        out, loss = content_loss(x, t)
        out = jax.block_until_ready(out)
        loss = jax.block_until_ready(loss)
        ref = _reference_loss(x, t)
        assert out.shape == x.shape and out.dtype == x.dtype
        assert bool(jnp.all(out == x)), "forward must return input unchanged"
        assert jnp.allclose(loss, ref, rtol=1e-5, atol=1e-6), (shape, dtype, loss, ref)

    keys = jax.random.split(key, 4)
    # Small NCHW feature map (the module's typical input): batch=2, ch=4, 16x16.
    run_case(keys[0], (2, 4, 16, 16))
    # Awkward size (n % 128 != 0): exercises the rare small-pad path.
    run_case(keys[1], (3, 5, 7, 11))
    # bf16 input: in-kernel f32 cast + dtype-aware tile sizing.
    run_case(keys[2], (2, 8, 16, 16), dtype=jnp.bfloat16)
    # Large input: multi-block grid, parallel split, partial-block masking and
    # the in-kernel sub-chunk loop.
    run_case(keys[3], (2, 10, 1000, 128))

    # Module-style usage, matching the PyTorch interface.
    k1, k2 = jax.random.split(jax.random.fold_in(key, 7))
    target = jax.random.normal(k1, (2, 4, 16, 16), dtype=jnp.float32)
    module = ContentLoss(target)
    x = jax.random.normal(k2, (2, 4, 16, 16), dtype=jnp.float32)
    y = jax.block_until_ready(module(x))
    assert jnp.allclose(module.loss, _reference_loss(x, target), rtol=1e-5, atol=1e-6)

    print("KERNEL_OK")
</pallas_src>

<mosaic_0001>
module attributes {stable_mosaic.version = 11 : i64} {
  func.func @_content_loss_kernel(%arg0: i32, %arg1: i32, %arg2: memref<16x128xf32, #tpu.memory_space<vmem>>, %arg3: memref<16x128xf32, #tpu.memory_space<vmem>>, %arg4: memref<8x128xf32, #tpu.memory_space<vmem>>, %arg5: memref<8x128xf32, #tpu.memory_space<vmem>>) attributes {dimension_semantics = [#tpu.dimension_semantics<parallel>, #tpu.dimension_semantics<arbitrary>], iteration_bounds = array<i64: 1, 1>, scalar_prefetch = 0 : i64, scratch_operands = 1 : i64, tpu.core_type = #tpu.core_type<tc>, window_params = [{transform_indices = @transform_0, window_bounds = array<i64: 16, 128>}, {transform_indices = @transform_1, window_bounds = array<i64: 16, 128>}, {transform_indices = @transform_2, window_bounds = array<i64: 8, 128>}]} {
    %c0_i32 = arith.constant 0 : i32
    %0 = arith.cmpi eq, %arg1, %c0_i32 : i32
    %1 = arith.extui %0 : i1 to i32
    %c0_i32_0 = arith.constant 0 : i32
    %2 = arith.cmpi ne, %1, %c0_i32_0 : i32
    scf.if %2 {
      %cst_10 = arith.constant 0.000000e+00 : f32
      %21 = vector.broadcast %cst_10 : f32 to vector<8x128xf32>
      %c0_11 = arith.constant 0 : index
      %c0_12 = arith.constant 0 : index
      %22 = vector.load %arg5[%c0_11, %c0_12] : memref<8x128xf32, #tpu.memory_space<vmem>>, vector<8x128xf32>
      tpu.vector_store %arg5[%c0_11, %c0_12], %21 {strides = array<i32>} : memref<8x128xf32, #tpu.memory_space<vmem>>, vector<8x128xf32>,
    } else {
    }
    %cst = arith.constant 0.000000e+00 : f32
    %3 = vector.broadcast %cst : f32 to vector<8x128xf32>
    %c0_i32_1 = arith.constant 0 : i32
    %c16_i32 = arith.constant 16 : i32
    %4 = arith.muli %c0_i32_1, %c16_i32 : i32
    %5 = tpu.assume_multiple %4, 16 : i32
    %6 = arith.index_cast %5 : i32 to index
    %c0 = arith.constant 0 : index
    %7 = vector.load %arg2[%6, %c0] : memref<16x128xf32, #tpu.memory_space<vmem>>, vector<16x128xf32>
    %8 = arith.index_cast %5 : i32 to index
    %c0_2 = arith.constant 0 : index
    %9 = vector.load %arg3[%8, %c0_2] : memref<16x128xf32, #tpu.memory_space<vmem>>, vector<16x128xf32>
    %10 = arith.subf %7, %9 : vector<16x128xf32>
    %11 = arith.mulf %10, %10 : vector<16x128xf32>
    %12 = vector.shape_cast %11 : vector<16x128xf32> to vector<2x8x128xf32>
    %cst_3 = arith.constant dense<0.000000e+00> : vector<8x128xf32>
    %13 = vector.multi_reduction <add>, %12, %cst_3 [0] : vector<2x8x128xf32> to vector<8x128xf32>
    %14 = arith.addf %3, %13 : vector<8x128xf32>
    %c1_i32 = arith.constant 1 : i32
    %c0_4 = arith.constant 0 : index
    %c0_5 = arith.constant 0 : index
    %15 = vector.load %arg5[%c0_4, %c0_5] : memref<8x128xf32, #tpu.memory_space<vmem>>, vector<8x128xf32>
    %16 = arith.addf %15, %14 : vector<8x128xf32>
    %c0_6 = arith.constant 0 : index
    %c0_7 = arith.constant 0 : index
    %17 = vector.load %arg5[%c0_6, %c0_7] : memref<8x128xf32, #tpu.memory_space<vmem>>, vector<8x128xf32>
    tpu.vector_store %arg5[%c0_6, %c0_7], %16 {strides = array<i32>} : memref<8x128xf32, #tpu.memory_space<vmem>>, vector<8x128xf32>,
    %c0_i32_8 = arith.constant 0 : i32
    %18 = arith.cmpi eq, %arg1, %c0_i32_8 : i32
    %19 = arith.extui %18 : i1 to i32
    %c0_i32_9 = arith.constant 0 : i32
    %20 = arith.cmpi ne, %19, %c0_i32_9 : i32
    scf.if %20 {
      %c0_10 = arith.constant 0 : index
      %c0_11 = arith.constant 0 : index
      %21 = vector.load %arg5[%c0_10, %c0_11] : memref<8x128xf32, #tpu.memory_space<vmem>>, vector<8x128xf32>
      %c0_12 = arith.constant 0 : index
      %c0_13 = arith.constant 0 : index
      %22 = vector.load %arg4[%c0_12, %c0_13] : memref<8x128xf32, #tpu.memory_space<vmem>>, vector<8x128xf32>
      tpu.vector_store %arg4[%c0_12, %c0_13], %21 {strides = array<i32>} : memref<8x128xf32, #tpu.memory_space<vmem>>, vector<8x128xf32>,
    } else {
    }
    return
  }
  func.func @transform_0(%arg0: i32, %arg1: i32) -> (i32, i32) {
    %c1_i32 = arith.constant 1 : i32
    %0 = arith.muli %arg0, %c1_i32 : i32
    %1 = arith.addi %0, %arg1 : i32
    %c0_i32 = arith.constant 0 : i32
    %2 = arith.minsi %1, %c0_i32 : i32
    %c0_i32_0 = arith.constant 0 : i32
    %c0_i32_1 = arith.constant 0 : i32
    return %2, %c0_i32_0 : i32, i32
  }
  func.func @transform_1(%arg0: i32, %arg1: i32) -> (i32, i32) {
    %c1_i32 = arith.constant 1 : i32
    %0 = arith.muli %arg0, %c1_i32 : i32
    %1 = arith.addi %0, %arg1 : i32
    %c0_i32 = arith.constant 0 : i32
    %2 = arith.minsi %1, %c0_i32 : i32
    %c0_i32_0 = arith.constant 0 : i32
    %c0_i32_1 = arith.constant 0 : i32
    return %2, %c0_i32_0 : i32, i32
  }
  func.func @transform_2(%arg0: i32, %arg1: i32) -> (i32, i32) {
    %c0_i32 = arith.constant 0 : i32
    %c0_i32_0 = arith.constant 0 : i32
    return %arg0, %c0_i32 : i32, i32
  }
}

</mosaic_0001>

<llo_original>
// kernel: tpu_custom_call.1
$region0: #{tpu_custom_call.1}
  #allocation0 [shape = 'u32[]', space=smem, size = 0x4, offset = 0x4, fixed_abs, tag = 'smem constant byte address 0x4 - core index']
  #allocation1 [shape = 'u32[72,128]{1,0:T(1,128)}', space=vmem, size = 0x9000, scoped, tag = 'internal scratch']
  #allocation2 [shape = 'f32[8,128]{1,0:T(8,128)}', space=vmem, size = 0x1000, scoped, tag = 'scratch operand']
  %s0 = inlined_call_operand.hbm [shape: f32[16,128], index: 0, kind: input, shape index: {}]
  %s1 = inlined_call_operand.hbm [shape: f32[16,128], index: 1, kind: input, shape index: {}]
  %s2 = inlined_call_operand.hbm [shape: f32[8,128], index: 2, kind: output, shape index: {}]
  %s3 = sld [smem:[#allocation0]]
  $region34: #{tpu_custom_call.1} parent=0
    _
  %s5 = ssub.s32 1, %s3
  %s6 = scalar_select 0, %s5, %s3
  $region1: #{tpu_custom_call.1} parent=0
    #allocation3 [shape = 'u8[8192]{0}', space=vmem, size = 0x2000, scoped, tag = 'input window, operand 0, single buffered']
    #allocation4 [shape = 's32[1]{0}', space=sflag, size = 0x4, scoped, tag = 'scoped memory for tpu_custom_call.1']
    #allocation5 [shape = 's32[1]{0}', space=sflag, size = 0x4, scoped, tag = 'scoped memory for tpu_custom_call.1']
    #allocation6 [shape = 'u8[8192]{0}', space=vmem, size = 0x2000, scoped, tag = 'input window, operand 1, single buffered']
    #allocation7 [shape = 's32[1]{0}', space=sflag, size = 0x4, scoped, tag = 'scoped memory for tpu_custom_call.1']
    #allocation8 [shape = 'u8[4096]{0}', space=vmem, size = 0x1000, scoped, tag = 'output window, operand 0, single buffered']
    %7 = vsyncpa [#allocation4], 0
    %8 = vsyncpa [#allocation7], 0
    %9 = vsyncpa [#allocation5], 0
    // Predicated region
    $region2: #{tpu_custom_call.1} parent=1 // pred_check
      _
    $region3: #{tpu_custom_call.1} parent=1 // pred_check_branch
      %11 = sbr.rel (0) target = $region5
    $region4: #{tpu_custom_call.1} parent=1 // pred_region
      %s12 = sadd.s32 0, 0
      %p13 = scmp.lt.s32.totalorder %s12, 0
      %s14 = scalar_select %p13, %s12, 0
      %s15 = smul.u32 2, %s14
      %17 = vsyncadd [#allocation4], 0
      %s18 = smul.addr %s15, 8
      %s19 = scalar_lea.hbm %s0, %s18
      %s20 = sshll.u32 %s19, 4
      %s21 = int_to_ptr.hbm [resolvable:$true] %s20
      %s22 = sshll.u32 [#allocation3], 4
      %s23 = int_to_ptr.vmem [resolvable:$true] %s22
      %28 = dma.hbm_to_vmem [thread:$0]  %s21, 256, %s23, [#allocation4], 128, 128, 8
    $region5: #{tpu_custom_call.1} parent=1 // pred_fallthru
      _
    // Predicated region
    $region6: #{tpu_custom_call.1} parent=1 // pred_check
      _
    $region7: #{tpu_custom_call.1} parent=1 // pred_check_branch
      %30 = sbr.rel (0) target = $region9
    $region8: #{tpu_custom_call.1} parent=1 // pred_region
      %s31 = sadd.s32 0, 0
      %p32 = scmp.lt.s32.totalorder %s31, 0
      %s33 = scalar_select %p32, %s31, 0
      %s34 = smul.u32 2, %s33
      %36 = vsyncadd [#allocation7], 0
      %s37 = smul.addr %s34, 8
      %s38 = scalar_lea.hbm %s1, %s37
      %s39 = sshll.u32 %s38, 4
      %s40 = int_to_ptr.hbm [resolvable:$true] %s39
      %s41 = sshll.u32 [#allocation6], 4
      %s42 = int_to_ptr.vmem [resolvable:$true] %s41
      %47 = dma.hbm_to_vmem [thread:$0]  %s40, 256, %s42, [#allocation7], 128, 128, 8
    $region9: #{tpu_custom_call.1} parent=1 // pred_fallthru
      _
    // Predicated region
    $region10: #{tpu_custom_call.1} parent=1 // pred_check
      _
    $region11: #{tpu_custom_call.1} parent=1 // pred_check_branch
      %49 = sbr.rel (0) target = $region13
    $region12: #{tpu_custom_call.1} parent=1 // pred_region
      %51 = dma.done [#allocation4], 256
    $region13: #{tpu_custom_call.1} parent=1 // pred_fallthru
      _
    // Predicated region
    $region14: #{tpu_custom_call.1} parent=1 // pred_check
      _
    $region15: #{tpu_custom_call.1} parent=1 // pred_check_branch
      %53 = sbr.rel (0) target = $region17
    $region16: #{tpu_custom_call.1} parent=1 // pred_region
      %55 = dma.done [#allocation7], 256
    $region17: #{tpu_custom_call.1} parent=1 // pred_fallthru
      _
    %s56 = sadd.s32 0, 0
    %p57 = scmp.lt.s32.totalorder %s56, 0
    %s58 = scalar_select %p57, %s56, 0
    %s59 = smul.u32 2, %s58
    %s60 = sadd.s32 0, 0
    %p61 = scmp.lt.s32.totalorder %s60, 0
    %s62 = scalar_select %p61, %s60, 0
    %s63 = smul.u32 2, %s62
    %p64 = scmp.eq.s32.totalorder 0, 0
    // Predicated region
    $region18: #{tpu_custom_call.1} parent=1 // pred_check
      %p65 = pneg %p64
    $region19: #{tpu_custom_call.1} parent=1 // pred_check_branch
      %67 = sbr.rel (%p65) target = $region21
    $region20: #{tpu_custom_call.1} parent=1 // pred_region
      %68 = vst [vmem:[#allocation2] sm:$0xff] 0.0
    $region21: #{tpu_custom_call.1} parent=1 // pred_fallthru
      _
    %v69 = vld [vmem:[#allocation3] sm:$0xff]
    %v70 = vld [vmem:[#allocation3 + $0x8] sm:$0xff]
    %v71 = vld [vmem:[#allocation6] sm:$0xff]
    %v72 = vld [vmem:[#allocation6 + $0x8] sm:$0xff]
    %v73 = vsub.f32 %v69, %v71
    %v74 = vsub.f32 %v70, %v72
    %v75 = vmul.f32 %v73, %v73
    %v76 = vmul.f32 %v74, %v74
    %v77 = vadd.f32 %v75, %v76
    %v78 = vadd.f32 %v77, 0.0
    %v79 = vld [vmem:[#allocation2] sm:$0xff]
    %v80 = vadd.f32 %v79, %v78
    %81 = vst [vmem:[#allocation2] sm:$0xff] %v80
    // Predicated region
    $region22: #{tpu_custom_call.1} parent=1 // pred_check
      %p82 = pneg %p64
    $region23: #{tpu_custom_call.1} parent=1 // pred_check_branch
      %84 = sbr.rel (%p82) target = $region25
    $region24: #{tpu_custom_call.1} parent=1 // pred_region
      %v85 = vld [vmem:[#allocation2] sm:$0xff]
      %86 = vst [vmem:[#allocation8] sm:$0xff] %v85
    $region25: #{tpu_custom_call.1} parent=1 // pred_fallthru
      _
    // Predicated region
    $region26: #{tpu_custom_call.1} parent=1 // pred_check
      _
    $region27: #{tpu_custom_call.1} parent=1 // pred_check_branch
      %88 = sbr.rel (0) target = $region29
    $region28: #{tpu_custom_call.1} parent=1 // pred_region
      %90 = vsyncadd [#allocation5], 0
      %s92 = sshll.u32 [#allocation8], 4
      %s93 = int_to_ptr.vmem [resolvable:$true] %s92
      %s94 = sshll.u32 %s2, 4
      %s95 = int_to_ptr.hbm [resolvable:$true] %s94
      %97 = dma.vmem_to_hbm [thread:$0]  %s93, 128, %s95, [#allocation5]
    $region29: #{tpu_custom_call.1} parent=1 // pred_fallthru
      _
    // Predicated region
    $region30: #{tpu_custom_call.1} parent=1 // pred_check
      _
    $region31: #{tpu_custom_call.1} parent=1 // pred_check_branch
      %99 = sbr.rel (0) target = $region33
    $region32: #{tpu_custom_call.1} parent=1 // pred_region
      %101 = dma.done [#allocation5], 128
    $region33: #{tpu_custom_call.1} parent=1 // pred_fallthru
      _
    %102 = vsyncpa [#allocation4], 1
    %103 = vsyncpa [#allocation7], 1
    %104 = vsyncpa [#allocation5], 1

</llo_original>
